<compile_context>
chip_gen: v7x
topology: tpu7x:2x2x1
jax: 0.10.0
libtpu: 0.0.40
codegen_flags: <defaults>
</compile_context>

<pallas_src>
import functools

import jax
import jax.numpy as jnp
from jax import lax
from jax.experimental import pallas as pl
from jax.experimental.pallas import tpu as pltpu


def _triplet_ntxent_kernel(u_ref, v_ref, w_ref, o_ref, *, temperature):
    B = u_ref.shape[0]
    inv_sqrt_t = jnp.float32(1.0) / jnp.sqrt(jnp.float32(temperature))

    def prescale(ref):
        x = ref[...].astype(jnp.float32)
        ssq = jnp.sum(x * x, axis=-1, keepdims=True)            # (B, 1)
        # clamp(norm, 1e-8) == clamp(norm^2, 1e-16); rsqrt goes to the EUP.
        inv_norm = lax.rsqrt(jnp.maximum(ssq, jnp.float32(1e-16)))
        return x * (inv_norm * inv_sqrt_t)                       # (B, D)

    u_s = prescale(u_ref)
    v_s = prescale(v_ref)
    w_s = prescale(w_ref)

    def gram(a, b):
        # Contract the feature dims directly -> no explicit transpose.
        return lax.dot_general(a, b, (((1,), (1,)), ((), ())),
                               preferred_element_type=jnp.float32)

    # Single reused (B, B) diagonal mask, applied only to the self blocks.
    ridx = lax.broadcasted_iota(jnp.int32, (B, B), 0)
    cidx = lax.broadcasted_iota(jnp.int32, (B, B), 1)
    diag = ridx == cidx
    neg = jnp.float32(-1e30)

    guu = jnp.where(diag, neg, gram(u_s, u_s))
    gvv = jnp.where(diag, neg, gram(v_s, v_s))
    gww = jnp.where(diag, neg, gram(w_s, w_s))
    guv = gram(u_s, v_s)
    guw = gram(u_s, w_s)
    gvw = gram(v_s, w_s)
    # Mirror blocks as swapped-operand matmuls so every block stays
    # lane-origin aligned (no slicing / relayout of a big Gram).
    # TODO(synk): at large B these three can become XLU transposes of
    # guv/guw/gvw to cut MXU block-FLOPs from 9*B^2*D to 6*B^2*D.
    gvu = gram(v_s, u_s)
    gwu = gram(w_s, u_s)
    gwv = gram(w_s, v_s)

    def rmax(x):
        return jnp.max(x, axis=-1, keepdims=True)

    # One shared row max per direction -> each block exp'd exactly once.
    m_u = jnp.maximum(jnp.maximum(rmax(guu), rmax(guv)), rmax(guw))
    m_v = jnp.maximum(jnp.maximum(rmax(gvu), rmax(gvv)), rmax(gvw))
    m_w = jnp.maximum(jnp.maximum(rmax(gwu), rmax(gwv)), rmax(gww))

    def esum(x, m):
        return jnp.sum(jnp.exp(x - m), axis=-1, keepdims=True)   # (B, 1)

    suu, suv, suw = esum(guu, m_u), esum(guv, m_u), esum(guw, m_u)
    svu, svv, svw = esum(gvu, m_v), esum(gvv, m_v), esum(gvw, m_v)
    swu, swv, sww = esum(gwu, m_w), esum(gwv, m_w), esum(gww, m_w)

    def lse_sum(m, a, b):
        # Split logsumexp: combine (B, 1) partial sums only, then reduce.
        return jnp.sum(m + jnp.log(a + b))

    # Positive logits as rowwise dots of the pre-scaled reps (O(B*D)); each
    # pair's positives appear twice (rows from a and rows from b).
    pos_uv = jnp.sum(u_s * v_s)
    pos_uw = jnp.sum(u_s * w_s)
    pos_vw = jnp.sum(v_s * w_s)

    inv_n = jnp.float32(1.0 / (2 * B))
    loss_uv = (lse_sum(m_u, suu, suv) + lse_sum(m_v, svu, svv)
               - 2.0 * pos_uv) * inv_n
    loss_uw = (lse_sum(m_u, suu, suw) + lse_sum(m_w, swu, sww)
               - 2.0 * pos_uw) * inv_n
    loss_vw = (lse_sum(m_v, svv, svw) + lse_sum(m_w, swv, sww)
               - 2.0 * pos_vw) * inv_n

    o_ref[0, 0] = (loss_uv + loss_uw + loss_vw) * jnp.float32(1.0 / 3.0)


def _round_up(x, m):
    return (x + m - 1) // m * m


@functools.partial(jax.jit, static_argnames=("temperature",))
def triplet_ntxent_loss(proj_u, proj_v, proj_w, temperature=0.5):
    B, D = proj_u.shape
    assert proj_v.shape == (B, D) and proj_w.shape == (B, D)
    if B == 0:  # matches the PyTorch batch_size == 0 early return
        return jnp.float32(0.0)

    # Static VMEM footprint estimate: inputs (native dtype) + f32 scaled copies
    # + 9 BxB f32 blocks and their exp'd counterparts, lane/sublane padded.
    bs = _round_up(B, 8)
    bl = _round_up(B, 128)
    dl = _round_up(D, 128)
    in_bytes = 3 * bs * dl * proj_u.dtype.itemsize
    f32_bytes = 3 * bs * dl * 4
    blk_bytes = 9 * bs * bl * 4 * 2
    est = 2 * (in_bytes + f32_bytes + blk_bytes) + (1 << 20)
    vmem_limit = int(min(max(est, 32 << 20), 96 << 20))

    kernel = functools.partial(_triplet_ntxent_kernel,
                               temperature=float(temperature))
    out = pl.pallas_call(
        kernel,
        out_shape=jax.ShapeDtypeStruct((1, 1), jnp.float32),
        in_specs=[pl.BlockSpec(memory_space=pltpu.MemorySpace.VMEM)] * 3,
        out_specs=pl.BlockSpec(memory_space=pltpu.MemorySpace.SMEM),
        compiler_params=pltpu.CompilerParams(vmem_limit_bytes=vmem_limit),
    )(proj_u, proj_v, proj_w)
    return out[0, 0]


def _ntxent_ref(pi, pj, temperature):
    """Pure-JAX reference mirroring the PyTorch NTXentLoss."""
    bsz = pi.shape[0]
    reps = jnp.concatenate([pi, pj], axis=0)
    n = 2 * bsz
    dots = reps @ reps.T
    norms = jnp.sqrt(jnp.sum(reps * reps, axis=-1, keepdims=True))
    sim = dots / jnp.maximum(norms * norms.T, 1e-8)
    logits = jnp.where(jnp.eye(n, dtype=bool), -jnp.inf, sim) / temperature
    labels = jnp.concatenate([jnp.arange(bsz, n), jnp.arange(bsz)])
    lse = jax.nn.logsumexp(logits, axis=-1)
    pos = logits[jnp.arange(n), labels]
    return jnp.sum(lse - pos) / n


def _triplet_ref(u, v, w, temperature):
    return (_ntxent_ref(u, v, temperature)
            + _ntxent_ref(u, w, temperature)
            + _ntxent_ref(v, w, temperature)) / 3.0


if __name__ == "__main__":
    key = jax.random.PRNGKey(0)
    ku, kv, kw = jax.random.split(key, 3)
    B, D = 8, 32
    temperature = 0.5

    proj_u = jax.random.normal(ku, (B, D), dtype=jnp.float32)
    proj_v = jax.random.normal(kv, (B, D), dtype=jnp.float32)
    proj_w = jax.random.normal(kw, (B, D), dtype=jnp.float32)

    loss = triplet_ntxent_loss(proj_u, proj_v, proj_w, temperature=temperature)
    loss = jax.block_until_ready(loss)

    ref = _triplet_ref(proj_u, proj_v, proj_w, temperature)
    assert jnp.allclose(loss, ref, rtol=1e-5, atol=1e-5), (loss, ref)

    print("KERNEL_OK")
</pallas_src>

<mosaic_0001>
module attributes {stable_mosaic.version = 11 : i64} {
  func.func @_triplet_ntxent_kernel(%arg0: memref<8x32xf32, #tpu.memory_space<vmem>>, %arg1: memref<8x32xf32, #tpu.memory_space<vmem>>, %arg2: memref<8x32xf32, #tpu.memory_space<vmem>>, %arg3: memref<1x1xf32, #tpu.memory_space<smem>>) attributes {dimension_semantics = [], scalar_prefetch = 0 : i64, scratch_operands = 0 : i64, tpu.core_type = #tpu.core_type<tc>} {
    %cst = arith.constant 5.000000e-01 : f32
    %0 = math.sqrt %cst : f32
    %cst_0 = arith.constant 1.000000e+00 : f32
    %1 = arith.divf %cst_0, %0 : f32
    %c0 = arith.constant 0 : index
    %c0_1 = arith.constant 0 : index
    %2 = vector.load %arg0[%c0, %c0_1] : memref<8x32xf32, #tpu.memory_space<vmem>>, vector<8x32xf32>
    %3 = arith.mulf %2, %2 : vector<8x32xf32>
    %cst_2 = arith.constant dense<0.000000e+00> : vector<8xf32>
    %4 = vector.multi_reduction <add>, %3, %cst_2 [1] : vector<8x32xf32> to vector<8xf32>
    %5 = vector.shape_cast %4 : vector<8xf32> to vector<8x1xf32>
    %cst_3 = arith.constant 1.000000e-16 : f32
    %6 = vector.broadcast %cst_3 : f32 to vector<8x1xf32>
    %7 = arith.maximumf %5, %6 : vector<8x1xf32>
    %8 = math.rsqrt %7 : vector<8x1xf32>
    %9 = vector.broadcast %1 : f32 to vector<8x1xf32>
    %10 = arith.mulf %8, %9 : vector<8x1xf32>
    %11 = vector.broadcast %10 : vector<8x1xf32> to vector<8x32xf32>
    %12 = arith.mulf %2, %11 : vector<8x32xf32>
    %c0_4 = arith.constant 0 : index
    %c0_5 = arith.constant 0 : index
    %13 = vector.load %arg1[%c0_4, %c0_5] : memref<8x32xf32, #tpu.memory_space<vmem>>, vector<8x32xf32>
    %14 = arith.mulf %13, %13 : vector<8x32xf32>
    %cst_6 = arith.constant dense<0.000000e+00> : vector<8xf32>
    %15 = vector.multi_reduction <add>, %14, %cst_6 [1] : vector<8x32xf32> to vector<8xf32>
    %16 = vector.shape_cast %15 : vector<8xf32> to vector<8x1xf32>
    %cst_7 = arith.constant 1.000000e-16 : f32
    %17 = vector.broadcast %cst_7 : f32 to vector<8x1xf32>
    %18 = arith.maximumf %16, %17 : vector<8x1xf32>
    %19 = math.rsqrt %18 : vector<8x1xf32>
    %20 = vector.broadcast %1 : f32 to vector<8x1xf32>
    %21 = arith.mulf %19, %20 : vector<8x1xf32>
    %22 = vector.broadcast %21 : vector<8x1xf32> to vector<8x32xf32>
    %23 = arith.mulf %13, %22 : vector<8x32xf32>
    %c0_8 = arith.constant 0 : index
    %c0_9 = arith.constant 0 : index
    %24 = vector.load %arg2[%c0_8, %c0_9] : memref<8x32xf32, #tpu.memory_space<vmem>>, vector<8x32xf32>
    %25 = arith.mulf %24, %24 : vector<8x32xf32>
    %cst_10 = arith.constant dense<0.000000e+00> : vector<8xf32>
    %26 = vector.multi_reduction <add>, %25, %cst_10 [1] : vector<8x32xf32> to vector<8xf32>
    %27 = vector.shape_cast %26 : vector<8xf32> to vector<8x1xf32>
    %cst_11 = arith.constant 1.000000e-16 : f32
    %28 = vector.broadcast %cst_11 : f32 to vector<8x1xf32>
    %29 = arith.maximumf %27, %28 : vector<8x1xf32>
    %30 = math.rsqrt %29 : vector<8x1xf32>
    %31 = vector.broadcast %1 : f32 to vector<8x1xf32>
    %32 = arith.mulf %30, %31 : vector<8x1xf32>
    %33 = vector.broadcast %32 : vector<8x1xf32> to vector<8x32xf32>
    %34 = arith.mulf %24, %33 : vector<8x32xf32>
    %35 = tpu.iota {dimensions = array<i32: 0>} : vector<8x8xi32>
    %36 = tpu.iota {dimensions = array<i32: 1>} : vector<8x8xi32>
    %37 = arith.cmpi eq, %35, %36 : vector<8x8xi32>
    %cst_12 = arith.constant dense<0.000000e+00> : vector<8x8xf32>
    %38 = tpu.matmul %12, %12, %cst_12 {dimension_numbers = #tpu.dot_dimension_numbers<[1], [1], [0], [0], [0, 0, 1, 0], [], []>} : vector<8x32xf32>, vector<8x32xf32>, vector<8x8xf32> -> vector<8x8xf32>
    %cst_13 = arith.constant -1.000000e+30 : f32
    %39 = vector.broadcast %cst_13 : f32 to vector<8x8xf32>
    %40 = arith.select %37, %39, %38 : vector<8x8xi1>, vector<8x8xf32>
    %cst_14 = arith.constant dense<0.000000e+00> : vector<8x8xf32>
    %41 = tpu.matmul %23, %23, %cst_14 {dimension_numbers = #tpu.dot_dimension_numbers<[1], [1], [0], [0], [0, 0, 1, 0], [], []>} : vector<8x32xf32>, vector<8x32xf32>, vector<8x8xf32> -> vector<8x8xf32>
    %cst_15 = arith.constant -1.000000e+30 : f32
    %42 = vector.broadcast %cst_15 : f32 to vector<8x8xf32>
    %43 = arith.select %37, %42, %41 : vector<8x8xi1>, vector<8x8xf32>
    %cst_16 = arith.constant dense<0.000000e+00> : vector<8x8xf32>
    %44 = tpu.matmul %34, %34, %cst_16 {dimension_numbers = #tpu.dot_dimension_numbers<[1], [1], [0], [0], [0, 0, 1, 0], [], []>} : vector<8x32xf32>, vector<8x32xf32>, vector<8x8xf32> -> vector<8x8xf32>
    %cst_17 = arith.constant -1.000000e+30 : f32
    %45 = vector.broadcast %cst_17 : f32 to vector<8x8xf32>
    %46 = arith.select %37, %45, %44 : vector<8x8xi1>, vector<8x8xf32>
    %cst_18 = arith.constant dense<0.000000e+00> : vector<8x8xf32>
    %47 = tpu.matmul %12, %23, %cst_18 {dimension_numbers = #tpu.dot_dimension_numbers<[1], [1], [0], [0], [0, 0, 1, 0], [], []>} : vector<8x32xf32>, vector<8x32xf32>, vector<8x8xf32> -> vector<8x8xf32>
    %cst_19 = arith.constant dense<0.000000e+00> : vector<8x8xf32>
    %48 = tpu.matmul %12, %34, %cst_19 {dimension_numbers = #tpu.dot_dimension_numbers<[1], [1], [0], [0], [0, 0, 1, 0], [], []>} : vector<8x32xf32>, vector<8x32xf32>, vector<8x8xf32> -> vector<8x8xf32>
    %cst_20 = arith.constant dense<0.000000e+00> : vector<8x8xf32>
    %49 = tpu.matmul %23, %34, %cst_20 {dimension_numbers = #tpu.dot_dimension_numbers<[1], [1], [0], [0], [0, 0, 1, 0], [], []>} : vector<8x32xf32>, vector<8x32xf32>, vector<8x8xf32> -> vector<8x8xf32>
    %cst_21 = arith.constant dense<0.000000e+00> : vector<8x8xf32>
    %50 = tpu.matmul %23, %12, %cst_21 {dimension_numbers = #tpu.dot_dimension_numbers<[1], [1], [0], [0], [0, 0, 1, 0], [], []>} : vector<8x32xf32>, vector<8x32xf32>, vector<8x8xf32> -> vector<8x8xf32>
    %cst_22 = arith.constant dense<0.000000e+00> : vector<8x8xf32>
    %51 = tpu.matmul %34, %12, %cst_22 {dimension_numbers = #tpu.dot_dimension_numbers<[1], [1], [0], [0], [0, 0, 1, 0], [], []>} : vector<8x32xf32>, vector<8x32xf32>, vector<8x8xf32> -> vector<8x8xf32>
    %cst_23 = arith.constant dense<0.000000e+00> : vector<8x8xf32>
    %52 = tpu.matmul %34, %23, %cst_23 {dimension_numbers = #tpu.dot_dimension_numbers<[1], [1], [0], [0], [0, 0, 1, 0], [], []>} : vector<8x32xf32>, vector<8x32xf32>, vector<8x8xf32> -> vector<8x8xf32>
    %cst_24 = arith.constant dense<0xFF800000> : vector<8xf32>
    %53 = vector.multi_reduction <maximumf>, %40, %cst_24 [1] : vector<8x8xf32> to vector<8xf32>
    %54 = vector.shape_cast %53 : vector<8xf32> to vector<8x1xf32>
    %cst_25 = arith.constant dense<0xFF800000> : vector<8xf32>
    %55 = vector.multi_reduction <maximumf>, %47, %cst_25 [1] : vector<8x8xf32> to vector<8xf32>
    %56 = vector.shape_cast %55 : vector<8xf32> to vector<8x1xf32>
    %57 = arith.maximumf %54, %56 : vector<8x1xf32>
    %cst_26 = arith.constant dense<0xFF800000> : vector<8xf32>
    %58 = vector.multi_reduction <maximumf>, %48, %cst_26 [1] : vector<8x8xf32> to vector<8xf32>
    %59 = vector.shape_cast %58 : vector<8xf32> to vector<8x1xf32>
    %60 = arith.maximumf %57, %59 : vector<8x1xf32>
    %cst_27 = arith.constant dense<0xFF800000> : vector<8xf32>
    %61 = vector.multi_reduction <maximumf>, %50, %cst_27 [1] : vector<8x8xf32> to vector<8xf32>
    %62 = vector.shape_cast %61 : vector<8xf32> to vector<8x1xf32>
    %cst_28 = arith.constant dense<0xFF800000> : vector<8xf32>
    %63 = vector.multi_reduction <maximumf>, %43, %cst_28 [1] : vector<8x8xf32> to vector<8xf32>
    %64 = vector.shape_cast %63 : vector<8xf32> to vector<8x1xf32>
    %65 = arith.maximumf %62, %64 : vector<8x1xf32>
    %cst_29 = arith.constant dense<0xFF800000> : vector<8xf32>
    %66 = vector.multi_reduction <maximumf>, %49, %cst_29 [1] : vector<8x8xf32> to vector<8xf32>
    %67 = vector.shape_cast %66 : vector<8xf32> to vector<8x1xf32>
    %68 = arith.maximumf %65, %67 : vector<8x1xf32>
    %cst_30 = arith.constant dense<0xFF800000> : vector<8xf32>
    %69 = vector.multi_reduction <maximumf>, %51, %cst_30 [1] : vector<8x8xf32> to vector<8xf32>
    %70 = vector.shape_cast %69 : vector<8xf32> to vector<8x1xf32>
    %cst_31 = arith.constant dense<0xFF800000> : vector<8xf32>
    %71 = vector.multi_reduction <maximumf>, %52, %cst_31 [1] : vector<8x8xf32> to vector<8xf32>
    %72 = vector.shape_cast %71 : vector<8xf32> to vector<8x1xf32>
    %73 = arith.maximumf %70, %72 : vector<8x1xf32>
    %cst_32 = arith.constant dense<0xFF800000> : vector<8xf32>
    %74 = vector.multi_reduction <maximumf>, %46, %cst_32 [1] : vector<8x8xf32> to vector<8xf32>
    %75 = vector.shape_cast %74 : vector<8xf32> to vector<8x1xf32>
    %76 = arith.maximumf %73, %75 : vector<8x1xf32>
    %77 = vector.broadcast %60 : vector<8x1xf32> to vector<8x8xf32>
    %78 = arith.subf %40, %77 : vector<8x8xf32>
    %79 = math.exp %78 : vector<8x8xf32>
    %cst_33 = arith.constant dense<0.000000e+00> : vector<8xf32>
    %80 = vector.multi_reduction <add>, %79, %cst_33 [1] : vector<8x8xf32> to vector<8xf32>
    %81 = vector.shape_cast %80 : vector<8xf32> to vector<8x1xf32>
    %82 = vector.broadcast %60 : vector<8x1xf32> to vector<8x8xf32>
    %83 = arith.subf %47, %82 : vector<8x8xf32>
    %84 = math.exp %83 : vector<8x8xf32>
    %cst_34 = arith.constant dense<0.000000e+00> : vector<8xf32>
    %85 = vector.multi_reduction <add>, %84, %cst_34 [1] : vector<8x8xf32> to vector<8xf32>
    %86 = vector.shape_cast %85 : vector<8xf32> to vector<8x1xf32>
    %87 = vector.broadcast %60 : vector<8x1xf32> to vector<8x8xf32>
    %88 = arith.subf %48, %87 : vector<8x8xf32>
    %89 = math.exp %88 : vector<8x8xf32>
    %cst_35 = arith.constant dense<0.000000e+00> : vector<8xf32>
    %90 = vector.multi_reduction <add>, %89, %cst_35 [1] : vector<8x8xf32> to vector<8xf32>
    %91 = vector.shape_cast %90 : vector<8xf32> to vector<8x1xf32>
    %92 = vector.broadcast %68 : vector<8x1xf32> to vector<8x8xf32>
    %93 = arith.subf %50, %92 : vector<8x8xf32>
    %94 = math.exp %93 : vector<8x8xf32>
    %cst_36 = arith.constant dense<0.000000e+00> : vector<8xf32>
    %95 = vector.multi_reduction <add>, %94, %cst_36 [1] : vector<8x8xf32> to vector<8xf32>
    %96 = vector.shape_cast %95 : vector<8xf32> to vector<8x1xf32>
    %97 = vector.broadcast %68 : vector<8x1xf32> to vector<8x8xf32>
    %98 = arith.subf %43, %97 : vector<8x8xf32>
    %99 = math.exp %98 : vector<8x8xf32>
    %cst_37 = arith.constant dense<0.000000e+00> : vector<8xf32>
    %100 = vector.multi_reduction <add>, %99, %cst_37 [1] : vector<8x8xf32> to vector<8xf32>
    %101 = vector.shape_cast %100 : vector<8xf32> to vector<8x1xf32>
    %102 = vector.broadcast %68 : vector<8x1xf32> to vector<8x8xf32>
    %103 = arith.subf %49, %102 : vector<8x8xf32>
    %104 = math.exp %103 : vector<8x8xf32>
    %cst_38 = arith.constant dense<0.000000e+00> : vector<8xf32>
    %105 = vector.multi_reduction <add>, %104, %cst_38 [1] : vector<8x8xf32> to vector<8xf32>
    %106 = vector.shape_cast %105 : vector<8xf32> to vector<8x1xf32>
    %107 = vector.broadcast %76 : vector<8x1xf32> to vector<8x8xf32>
    %108 = arith.subf %51, %107 : vector<8x8xf32>
    %109 = math.exp %108 : vector<8x8xf32>
    %cst_39 = arith.constant dense<0.000000e+00> : vector<8xf32>
    %110 = vector.multi_reduction <add>, %109, %cst_39 [1] : vector<8x8xf32> to vector<8xf32>
    %111 = vector.shape_cast %110 : vector<8xf32> to vector<8x1xf32>
    %112 = vector.broadcast %76 : vector<8x1xf32> to vector<8x8xf32>
    %113 = arith.subf %52, %112 : vector<8x8xf32>
    %114 = math.exp %113 : vector<8x8xf32>
    %cst_40 = arith.constant dense<0.000000e+00> : vector<8xf32>
    %115 = vector.multi_reduction <add>, %114, %cst_40 [1] : vector<8x8xf32> to vector<8xf32>
    %116 = vector.shape_cast %115 : vector<8xf32> to vector<8x1xf32>
    %117 = vector.broadcast %76 : vector<8x1xf32> to vector<8x8xf32>
    %118 = arith.subf %46, %117 : vector<8x8xf32>
    %119 = math.exp %118 : vector<8x8xf32>
    %cst_41 = arith.constant dense<0.000000e+00> : vector<8xf32>
    %120 = vector.multi_reduction <add>, %119, %cst_41 [1] : vector<8x8xf32> to vector<8xf32>
    %121 = vector.shape_cast %120 : vector<8xf32> to vector<8x1xf32>
    %122 = arith.mulf %12, %23 : vector<8x32xf32>
    %123 = vector.shape_cast %122 : vector<8x32xf32> to vector<1x8x32xf32>
    %cst_42 = arith.constant dense<0.000000e+00> : vector<1xf32>
    %124 = vector.multi_reduction <add>, %123, %cst_42 [1, 2] : vector<1x8x32xf32> to vector<1xf32>
    %125 = vector.shape_cast %124 : vector<1xf32> to vector<1x1x1xf32>
    %126 = vector.extract %125[0, 0, 0] : f32 from vector<1x1x1xf32>
    %127 = arith.mulf %12, %34 : vector<8x32xf32>
    %128 = vector.shape_cast %127 : vector<8x32xf32> to vector<1x8x32xf32>
    %cst_43 = arith.constant dense<0.000000e+00> : vector<1xf32>
    %129 = vector.multi_reduction <add>, %128, %cst_43 [1, 2] : vector<1x8x32xf32> to vector<1xf32>
    %130 = vector.shape_cast %129 : vector<1xf32> to vector<1x1x1xf32>
    %131 = vector.extract %130[0, 0, 0] : f32 from vector<1x1x1xf32>
    %132 = arith.mulf %23, %34 : vector<8x32xf32>
    %133 = vector.shape_cast %132 : vector<8x32xf32> to vector<1x8x32xf32>
    %cst_44 = arith.constant dense<0.000000e+00> : vector<1xf32>
    %134 = vector.multi_reduction <add>, %133, %cst_44 [1, 2] : vector<1x8x32xf32> to vector<1xf32>
    %135 = vector.shape_cast %134 : vector<1xf32> to vector<1x1x1xf32>
    %136 = vector.extract %135[0, 0, 0] : f32 from vector<1x1x1xf32>
    %137 = arith.addf %81, %86 : vector<8x1xf32>
    %138 = math.log %137 : vector<8x1xf32>
    %139 = arith.addf %60, %138 : vector<8x1xf32>
    %140 = vector.shape_cast %139 : vector<8x1xf32> to vector<1x8x1xf32>
    %cst_45 = arith.constant dense<0.000000e+00> : vector<1xf32>
    %141 = vector.multi_reduction <add>, %140, %cst_45 [1, 2] : vector<1x8x1xf32> to vector<1xf32>
    %142 = vector.shape_cast %141 : vector<1xf32> to vector<1x1x1xf32>
    %143 = vector.extract %142[0, 0, 0] : f32 from vector<1x1x1xf32>
    %144 = arith.addf %96, %101 : vector<8x1xf32>
    %145 = math.log %144 : vector<8x1xf32>
    %146 = arith.addf %68, %145 : vector<8x1xf32>
    %147 = vector.shape_cast %146 : vector<8x1xf32> to vector<1x8x1xf32>
    %cst_46 = arith.constant dense<0.000000e+00> : vector<1xf32>
    %148 = vector.multi_reduction <add>, %147, %cst_46 [1, 2] : vector<1x8x1xf32> to vector<1xf32>
    %149 = vector.shape_cast %148 : vector<1xf32> to vector<1x1x1xf32>
    %150 = vector.extract %149[0, 0, 0] : f32 from vector<1x1x1xf32>
    %151 = arith.addf %143, %150 : f32
    %cst_47 = arith.constant 2.000000e+00 : f32
    %152 = arith.mulf %cst_47, %126 : f32
    %153 = arith.subf %151, %152 : f32
    %cst_48 = arith.constant 6.250000e-02 : f32
    %154 = arith.mulf %153, %cst_48 : f32
    %155 = arith.addf %81, %91 : vector<8x1xf32>
    %156 = math.log %155 : vector<8x1xf32>
    %157 = arith.addf %60, %156 : vector<8x1xf32>
    %158 = vector.shape_cast %157 : vector<8x1xf32> to vector<1x8x1xf32>
    %cst_49 = arith.constant dense<0.000000e+00> : vector<1xf32>
    %159 = vector.multi_reduction <add>, %158, %cst_49 [1, 2] : vector<1x8x1xf32> to vector<1xf32>
    %160 = vector.shape_cast %159 : vector<1xf32> to vector<1x1x1xf32>
    %161 = vector.extract %160[0, 0, 0] : f32 from vector<1x1x1xf32>
    %162 = arith.addf %111, %121 : vector<8x1xf32>
    %163 = math.log %162 : vector<8x1xf32>
    %164 = arith.addf %76, %163 : vector<8x1xf32>
    %165 = vector.shape_cast %164 : vector<8x1xf32> to vector<1x8x1xf32>
    %cst_50 = arith.constant dense<0.000000e+00> : vector<1xf32>
    %166 = vector.multi_reduction <add>, %165, %cst_50 [1, 2] : vector<1x8x1xf32> to vector<1xf32>
    %167 = vector.shape_cast %166 : vector<1xf32> to vector<1x1x1xf32>
    %168 = vector.extract %167[0, 0, 0] : f32 from vector<1x1x1xf32>
    %169 = arith.addf %161, %168 : f32
    %cst_51 = arith.constant 2.000000e+00 : f32
    %170 = arith.mulf %cst_51, %131 : f32
    %171 = arith.subf %169, %170 : f32
    %cst_52 = arith.constant 6.250000e-02 : f32
    %172 = arith.mulf %171, %cst_52 : f32
    %173 = arith.addf %101, %106 : vector<8x1xf32>
    %174 = math.log %173 : vector<8x1xf32>
    %175 = arith.addf %68, %174 : vector<8x1xf32>
    %176 = vector.shape_cast %175 : vector<8x1xf32> to vector<1x8x1xf32>
    %cst_53 = arith.constant dense<0.000000e+00> : vector<1xf32>
    %177 = vector.multi_reduction <add>, %176, %cst_53 [1, 2] : vector<1x8x1xf32> to vector<1xf32>
    %178 = vector.shape_cast %177 : vector<1xf32> to vector<1x1x1xf32>
    %179 = vector.extract %178[0, 0, 0] : f32 from vector<1x1x1xf32>
    %180 = arith.addf %116, %121 : vector<8x1xf32>
    %181 = math.log %180 : vector<8x1xf32>
    %182 = arith.addf %76, %181 : vector<8x1xf32>
    %183 = vector.shape_cast %182 : vector<8x1xf32> to vector<1x8x1xf32>
    %cst_54 = arith.constant dense<0.000000e+00> : vector<1xf32>
    %184 = vector.multi_reduction <add>, %183, %cst_54 [1, 2] : vector<1x8x1xf32> to vector<1xf32>
    %185 = vector.shape_cast %184 : vector<1xf32> to vector<1x1x1xf32>
    %186 = vector.extract %185[0, 0, 0] : f32 from vector<1x1x1xf32>
    %187 = arith.addf %179, %186 : f32
    %cst_55 = arith.constant 2.000000e+00 : f32
    %188 = arith.mulf %cst_55, %136 : f32
    %189 = arith.subf %187, %188 : f32
    %cst_56 = arith.constant 6.250000e-02 : f32
    %190 = arith.mulf %189, %cst_56 : f32
    %191 = arith.addf %154, %172 : f32
    %192 = arith.addf %191, %190 : f32
    %cst_57 = arith.constant 0.333333343 : f32
    %193 = arith.mulf %192, %cst_57 : f32
    %c0_58 = arith.constant 0 : index
    %c0_59 = arith.constant 0 : index
    %194 = memref.load %arg3[%c0_58, %c0_59] : memref<1x1xf32, #tpu.memory_space<smem>>
    memref.store %193, %arg3[%c0_58, %c0_59] : memref<1x1xf32, #tpu.memory_space<smem>>
    return
  }
}

</mosaic_0001>

<llo_original>
// kernel: triplet_ntxent_loss.1
$region0: #{triplet_ntxent_loss.1}
  #allocation0 [shape = 'u32[]', space=smem, size = 0x4, offset = 0x4, fixed_abs, tag = 'smem constant byte address 0x4 - core index']
  #allocation1 [shape = 'u32[144,128]{1,0:T(1,128)}', space=vmem, size = 0x12000, scoped, tag = 'internal scratch']
  %s0 = inlined_call_operand.hbm [shape: f32[8,32], index: 0, kind: input, shape index: {}]
  %s1 = inlined_call_operand.hbm [shape: f32[8,32], index: 1, kind: input, shape index: {}]
  %s2 = inlined_call_operand.hbm [shape: f32[8,32], index: 2, kind: input, shape index: {}]
  %s3 = inlined_call_operand.hbm [shape: f32[1,1], index: 3, kind: output, shape index: {}]
  %s4 = sld [smem:[#allocation0]]
  $region34: #{triplet_ntxent_loss.1} parent=0
    _
  %s6 = ssub.s32 1, %s4
  %s7 = scalar_select 0, %s6, %s4
  $region1: #{triplet_ntxent_loss.1} parent=0
    #allocation2 [shape = 'u8[4096]{0}', space=vmem, size = 0x1000, scoped, tag = 'input window, operand 0, single buffered']
    #allocation3 [shape = 's32[1]{0}', space=sflag, size = 0x4, scoped, tag = 'scoped memory for triplet_ntxent_loss.1']
    #allocation4 [shape = 's32[1]{0}', space=sflag, size = 0x4, scoped, tag = 'scoped memory for triplet_ntxent_loss.1']
    #allocation5 [shape = 'u8[4096]{0}', space=vmem, size = 0x1000, scoped, tag = 'input window, operand 1, single buffered']
    #allocation6 [shape = 's32[1]{0}', space=sflag, size = 0x4, scoped, tag = 'scoped memory for triplet_ntxent_loss.1']
    #allocation7 [shape = 'u8[4096]{0}', space=vmem, size = 0x1000, scoped, tag = 'input window, operand 2, single buffered']
    #allocation8 [shape = 'u8[512]{0}', space=smem, size = 0x200, scoped, tag = 'output window, operand 0, single buffered']
    %8 = vsyncpa [#allocation3], 0
    %9 = vsyncpa [#allocation6], 0
    %10 = vsyncpa [#allocation4], 0
    // Predicated region
    $region2: #{triplet_ntxent_loss.1} parent=1 // pred_check
      _
    $region3: #{triplet_ntxent_loss.1} parent=1 // pred_check_branch
      %12 = sbr.rel (0) target = $region5
    $region4: #{triplet_ntxent_loss.1} parent=1 // pred_region
      %s14 = ssub.s32 128, 128
      %15 = vsyncadd [#allocation3], %s14
      %s17 = sshll.u32 [#allocation2], 4
      %s18 = int_to_ptr.vmem [resolvable:$true] %s17
      %20 = dma.hbm_to_vmem [thread:$0]  %s0, 128, %s18, [#allocation3]
    $region5: #{triplet_ntxent_loss.1} parent=1 // pred_fallthru
      _
    // Predicated region
    $region6: #{triplet_ntxent_loss.1} parent=1 // pred_check
      _
    $region7: #{triplet_ntxent_loss.1} parent=1 // pred_check_branch
      %22 = sbr.rel (0) target = $region9
    $region8: #{triplet_ntxent_loss.1} parent=1 // pred_region
      %s24 = ssub.s32 128, 128
      %25 = vsyncadd [#allocation6], %s24
      %s27 = sshll.u32 [#allocation5], 4
      %s28 = int_to_ptr.vmem [resolvable:$true] %s27
      %30 = dma.hbm_to_vmem [thread:$0]  %s1, 128, %s28, [#allocation6]
    $region9: #{triplet_ntxent_loss.1} parent=1 // pred_fallthru
      _
    // Predicated region
    $region10: #{triplet_ntxent_loss.1} parent=1 // pred_check
      _
    $region11: #{triplet_ntxent_loss.1} parent=1 // pred_check_branch
      %32 = sbr.rel (0) target = $region13
    $region12: #{triplet_ntxent_loss.1} parent=1 // pred_region
      %s34 = ssub.s32 128, 128
      %35 = vsyncadd [#allocation6], %s34
      %s37 = sshll.u32 [#allocation7], 4
      %s38 = int_to_ptr.vmem [resolvable:$true] %s37
      %40 = dma.hbm_to_vmem [thread:$0]  %s2, 128, %s38, [#allocation6]
    $region13: #{triplet_ntxent_loss.1} parent=1 // pred_fallthru
      _
    // Predicated region
    $region14: #{triplet_ntxent_loss.1} parent=1 // pred_check
      _
    $region15: #{triplet_ntxent_loss.1} parent=1 // pred_check_branch
      %42 = sbr.rel (0) target = $region17
    $region16: #{triplet_ntxent_loss.1} parent=1 // pred_region
      %43 = dma.done [#allocation3], 128
    $region17: #{triplet_ntxent_loss.1} parent=1 // pred_fallthru
      _
    // Predicated region
    $region18: #{triplet_ntxent_loss.1} parent=1 // pred_check
      _
    $region19: #{triplet_ntxent_loss.1} parent=1 // pred_check_branch
      %45 = sbr.rel (0) target = $region21
    $region20: #{triplet_ntxent_loss.1} parent=1 // pred_region
      %46 = dma.done [#allocation6], 128
    $region21: #{triplet_ntxent_loss.1} parent=1 // pred_fallthru
      _
    // Predicated region
    $region22: #{triplet_ntxent_loss.1} parent=1 // pred_check
      _
    $region23: #{triplet_ntxent_loss.1} parent=1 // pred_check_branch
      %48 = sbr.rel (0) target = $region25
    $region24: #{triplet_ntxent_loss.1} parent=1 // pred_region
      %49 = dma.done [#allocation6], 128
    $region25: #{triplet_ntxent_loss.1} parent=1 // pred_fallthru
      _
    %v50 = vld [vmem:[#allocation2] sm:$0xff]
    %v51 = vmul.f32 %v50, %v50
    %vm52 = vcmask 261120
    %v53 = vsel %vm52, %v51, 0.0
    %54 = vadd.xlane.f32.xlu0 %v53
    %v55 = vpop.xlane.xlu0 %54
    %v56 = vmax.f32 %v55, 1e-16
    %v57 = vrsqrt.pop %v56
    %v58 = vmul.f32 %v57, 1.4142135
    %v59 = vmul.f32 %v50, %v58
    %v60 = vld [vmem:[#allocation5] sm:$0xff]
    %v61 = vmul.f32 %v60, %v60
    %v62 = vsel %vm52, %v61, 0.0
    %63 = vadd.xlane.f32.xlu0 %v62
    %v64 = vpop.xlane.xlu0 %63
    %v65 = vmax.f32 %v64, 1e-16
    %v66 = vrsqrt.pop %v65
    %v67 = vmul.f32 %v66, 1.4142135
    %v68 = vmul.f32 %v60, %v67
    %v69 = vld [vmem:[#allocation7] sm:$0xff]
    %v70 = vmul.f32 %v69, %v69
    %v71 = vsel %vm52, %v70, 0.0
    %72 = vadd.xlane.f32.xlu0 %v71
    %v73 = vpop.xlane.xlu0 %72
    %v74 = vmax.f32 %v73, 1e-16
    %v75 = vrsqrt.pop %v74
    %v76 = vmul.f32 %v75, 1.4142135
    %v77 = vmul.f32 %v69, %v76
    %v78 = vlaneseq
    %v79 = vshrl.u32 %v78, 7
    %v80 = vlaneseq
    %v81 = vand.u32 %v80, 127
    %vm82 = vcmp.eq.s32.totalorder %v79, %v81
    %v84 = vsel %vm52, %v59, 0
    %86 = vmatprep.subr.mxu0 0.0
    %87 = vmatpush1.xpose.msra.mxu0 %v84
    %88 = vmatprep.subr.mxu0 0.0
    %89 = vmatpush1.xpose.msra.mxu0 0.0
    %90 = vmatprep.subr.mxu0 0.0
    %91 = vmatpush1.xpose.msra.mxu0 0.0
    %92 = vmatprep.subr.mxu0 0.0
    %93 = vmatpush1.xpose.msra.mxu0 0.0
    %94 = vmatprep.subr.mxu0 0.0
    %95 = vmatpush1.xpose.msra.mxu0 0.0
    %96 = vmatprep.subr.mxu0 0.0
    %97 = vmatpush1.xpose.msra.mxu0 0.0
    %98 = vmatprep.subr.mxu0 0.0
    %99 = vmatpush1.xpose.msra.mxu0 0.0
    %100 = vmatprep.subr.mxu0 0.0
    %101 = vmatpush1.xpose.msra.mxu0 0.0
    %102 = vmatprep.subr.mxu0 0.0
    %103 = vmatpush1.xpose.msra.mxu0 0.0
    %104 = vmatprep.subr.mxu0 0.0
    %105 = vmatpush1.xpose.msra.mxu0 0.0
    %106 = vmatprep.subr.mxu0 0.0
    %107 = vmatpush1.xpose.msra.mxu0 0.0
    %108 = vmatprep.subr.mxu0 0.0
    %109 = vmatpush1.xpose.msra.mxu0 0.0
    %110 = vmatprep.subr.mxu0 0.0
    %111 = vmatpush1.xpose.msra.mxu0 0.0
    %112 = vmatprep.subr.mxu0 0.0
    %113 = vmatpush1.xpose.msra.mxu0 0.0
    %114 = vmatprep.subr.mxu0 0.0
    %115 = vmatpush1.xpose.msra.mxu0 0.0
    %116 = vmatprep.subr.mxu0 0.0
    %117 = vmatpush1.xpose.msra.mxu0 0.0
    %118 = vmatprep.subr.mxu0 0.0
    %119 = vmatpush1.xpose.msra.mxu0 0.0
    %120 = vmatprep.subr.mxu0 0.0
    %121 = vmatpush1.xpose.msra.mxu0 0.0
    %122 = vmatprep.subr.mxu0 0.0
    %123 = vmatpush1.xpose.msra.mxu0 0.0
    %124 = vmatprep.subr.mxu0 0.0
    %125 = vmatpush1.xpose.msra.mxu0 0.0
    %126 = vmatprep.subr.mxu0 0.0
    %127 = vmatpush1.xpose.msra.mxu0 0.0
    %128 = vmatprep.subr.mxu0 0.0
    %129 = vmatpush1.xpose.msra.mxu0 0.0
    %130 = vmatprep.subr.mxu0 0.0
    %131 = vmatpush1.xpose.msra.mxu0 0.0
    %132 = vmatprep.subr.mxu0 0.0
    %133 = vmatpush1.xpose.msra.mxu0 0.0
    %134 = vmatprep.subr.mxu0 0.0
    %135 = vmatpush1.xpose.msra.mxu0 0.0
    %136 = vmatprep.subr.mxu0 0.0
    %137 = vmatpush1.xpose.msra.mxu0 0.0
    %138 = vmatprep.subr.mxu0 0.0
    %139 = vmatpush1.xpose.msra.mxu0 0.0
    %140 = vmatprep.subr.mxu0 0.0
    %141 = vmatpush1.xpose.msra.mxu0 0.0
    %142 = vmatprep.subr.mxu0 0.0
    %143 = vmatpush1.xpose.msra.mxu0 0.0
    %144 = vmatprep.subr.mxu0 0.0
    %145 = vmatpush1.xpose.msra.mxu0 0.0
    %146 = vmatprep.subr.mxu0 0.0
    %147 = vmatpush1.xpose.msra.mxu0 0.0
    %148 = vmatprep.subr.mxu0 0.0
    %149 = vmatpush1.xpose.msra.mxu0 0.0
    %150 = vmatprep.mubr.f32.mxu0 0.0
    %151 = vmatmul.mubr.f32.gmra.mrb[0].mxu0 %v84
    %v152 = vpop.f32.mrb[0].mxu0
    %v153 = vadd.f32 0.0, %v152
    %v154 = vpop.f32.mrb[0].mxu0
    %155 = vdwg.mxu0
    %v156 = vsel %vm82, -1e+30, %v153
    %v158 = vsel %vm52, %v68, 0
    %160 = vmatprep.subr.mxu0 0.0
    %161 = vmatpush1.xpose.msra.mxu0 %v158
    %162 = vmatprep.subr.mxu0 0.0
    %163 = vmatpush1.xpose.msra.mxu0 0.0
    %164 = vmatprep.subr.mxu0 0.0
    %165 = vmatpush1.xpose.msra.mxu0 0.0
    %166 = vmatprep.subr.mxu0 0.0
    %167 = vmatpush1.xpose.msra.mxu0 0.0
    %168 = vmatprep.subr.mxu0 0.0
    %169 = vmatpush1.xpose.msra.mxu0 0.0
    %170 = vmatprep.subr.mxu0 0.0
    %171 = vmatpush1.xpose.msra.mxu0 0.0
    %172 = vmatprep.subr.mxu0 0.0
    %173 = vmatpush1.xpose.msra.mxu0 0.0
    %174 = vmatprep.subr.mxu0 0.0
    %175 = vmatpush1.xpose.msra.mxu0 0.0
    %176 = vmatprep.subr.mxu0 0.0
    %177 = vmatpush1.xpose.msra.mxu0 0.0
    %178 = vmatprep.subr.mxu0 0.0
    %179 = vmatpush1.xpose.msra.mxu0 0.0
    %180 = vmatprep.subr.mxu0 0.0
    %181 = vmatpush1.xpose.msra.mxu0 0.0
    %182 = vmatprep.subr.mxu0 0.0
    %183 = vmatpush1.xpose.msra.mxu0 0.0
    %184 = vmatprep.subr.mxu0 0.0
    %185 = vmatpush1.xpose.msra.mxu0 0.0
    %186 = vmatprep.subr.mxu0 0.0
    %187 = vmatpush1.xpose.msra.mxu0 0.0
    %188 = vmatprep.subr.mxu0 0.0
    %189 = vmatpush1.xpose.msra.mxu0 0.0
    %190 = vmatprep.subr.mxu0 0.0
    %191 = vmatpush1.xpose.msra.mxu0 0.0
    %192 = vmatprep.subr.mxu0 0.0
    %193 = vmatpush1.xpose.msra.mxu0 0.0
    %194 = vmatprep.subr.mxu0 0.0
    %195 = vmatpush1.xpose.msra.mxu0 0.0
    %196 = vmatprep.subr.mxu0 0.0
    %197 = vmatpush1.xpose.msra.mxu0 0.0
    %198 = vmatprep.subr.mxu0 0.0
    %199 = vmatpush1.xpose.msra.mxu0 0.0
    %200 = vmatprep.subr.mxu0 0.0
    %201 = vmatpush1.xpose.msra.mxu0 0.0
    %202 = vmatprep.subr.mxu0 0.0
    %203 = vmatpush1.xpose.msra.mxu0 0.0
    %204 = vmatprep.subr.mxu0 0.0
    %205 = vmatpush1.xpose.msra.mxu0 0.0
    %206 = vmatprep.subr.mxu0 0.0
    %207 = vmatpush1.xpose.msra.mxu0 0.0
    %208 = vmatprep.subr.mxu0 0.0
    %209 = vmatpush1.xpose.msra.mxu0 0.0
    %210 = vmatprep.subr.mxu0 0.0
    %211 = vmatpush1.xpose.msra.mxu0 0.0
    %212 = vmatprep.subr.mxu0 0.0
    %213 = vmatpush1.xpose.msra.mxu0 0.0
    %214 = vmatprep.subr.mxu0 0.0
    %215 = vmatpush1.xpose.msra.mxu0 0.0
    %216 = vmatprep.subr.mxu0 0.0
    %217 = vmatpush1.xpose.msra.mxu0 0.0
    %218 = vmatprep.subr.mxu0 0.0
    %219 = vmatpush1.xpose.msra.mxu0 0.0
    %220 = vmatprep.subr.mxu0 0.0
    %221 = vmatpush1.xpose.msra.mxu0 0.0
    %222 = vmatprep.subr.mxu0 0.0
    %223 = vmatpush1.xpose.msra.mxu0 0.0
    %224 = vmatprep.mubr.f32.mxu0 0.0
    %225 = vmatmul.mubr.f32.gmra.mrb[0].mxu0 %v158
    %v226 = vpop.f32.mrb[0].mxu0
    %v227 = vadd.f32 0.0, %v226
    %v228 = vpop.f32.mrb[0].mxu0
    %229 = vdwg.mxu0
    %v230 = vsel %vm82, -1e+30, %v227
    %v232 = vsel %vm52, %v77, 0
    %234 = vmatprep.subr.mxu0 0.0
    %235 = vmatpush1.xpose.msra.mxu0 %v232
    %236 = vmatprep.subr.mxu0 0.0
    %237 = vmatpush1.xpose.msra.mxu0 0.0
    %238 = vmatprep.subr.mxu0 0.0
    %239 = vmatpush1.xpose.msra.mxu0 0.0
    %240 = vmatprep.subr.mxu0 0.0
    %241 = vmatpush1.xpose.msra.mxu0 0.0
    %242 = vmatprep.subr.mxu0 0.0
    %243 = vmatpush1.xpose.msra.mxu0 0.0
    %244 = vmatprep.subr.mxu0 0.0
    %245 = vmatpush1.xpose.msra.mxu0 0.0
    %246 = vmatprep.subr.mxu0 0.0
    %247 = vmatpush1.xpose.msra.mxu0 0.0
    %248 = vmatprep.subr.mxu0 0.0
    %249 = vmatpush1.xpose.msra.mxu0 0.0
    %250 = vmatprep.subr.mxu0 0.0
    %251 = vmatpush1.xpose.msra.mxu0 0.0
    %252 = vmatprep.subr.mxu0 0.0
    %253 = vmatpush1.xpose.msra.mxu0 0.0
    %254 = vmatprep.subr.mxu0 0.0
    %255 = vmatpush1.xpose.msra.mxu0 0.0
    %256 = vmatprep.subr.mxu0 0.0
    %257 = vmatpush1.xpose.msra.mxu0 0.0
    %258 = vmatprep.subr.mxu0 0.0
    %259 = vmatpush1.xpose.msra.mxu0 0.0
    %260 = vmatprep.subr.mxu0 0.0
    %261 = vmatpush1.xpose.msra.mxu0 0.0
    %262 = vmatprep.subr.mxu0 0.0
    %263 = vmatpush1.xpose.msra.mxu0 0.0
    %264 = vmatprep.subr.mxu0 0.0
    %265 = vmatpush1.xpose.msra.mxu0 0.0
    %266 = vmatprep.subr.mxu0 0.0
    %267 = vmatpush1.xpose.msra.mxu0 0.0
    %268 = vmatprep.subr.mxu0 0.0
    %269 = vmatpush1.xpose.msra.mxu0 0.0
    %270 = vmatprep.subr.mxu0 0.0
    %271 = vmatpush1.xpose.msra.mxu0 0.0
    %272 = vmatprep.subr.mxu0 0.0
    %273 = vmatpush1.xpose.msra.mxu0 0.0
    %274 = vmatprep.subr.mxu0 0.0
    %275 = vmatpush1.xpose.msra.mxu0 0.0
    %276 = vmatprep.subr.mxu0 0.0
    %277 = vmatpush1.xpose.msra.mxu0 0.0
    %278 = vmatprep.subr.mxu0 0.0
    %279 = vmatpush1.xpose.msra.mxu0 0.0
    %280 = vmatprep.subr.mxu0 0.0
    %281 = vmatpush1.xpose.msra.mxu0 0.0
    %282 = vmatprep.subr.mxu0 0.0
    %283 = vmatpush1.xpose.msra.mxu0 0.0
    %284 = vmatprep.subr.mxu0 0.0
    %285 = vmatpush1.xpose.msra.mxu0 0.0
    %286 = vmatprep.subr.mxu0 0.0
    %287 = vmatpush1.xpose.msra.mxu0 0.0
    %288 = vmatprep.subr.mxu0 0.0
    %289 = vmatpush1.xpose.msra.mxu0 0.0
    %290 = vmatprep.subr.mxu0 0.0
    %291 = vmatpush1.xpose.msra.mxu0 0.0
    %292 = vmatprep.subr.mxu0 0.0
    %293 = vmatpush1.xpose.msra.mxu0 0.0
    %294 = vmatprep.subr.mxu0 0.0
    %295 = vmatpush1.xpose.msra.mxu0 0.0
    %296 = vmatprep.subr.mxu0 0.0
    %297 = vmatpush1.xpose.msra.mxu0 0.0
    %298 = vmatprep.mubr.f32.mxu0 0.0
    %299 = vmatmul.mubr.f32.gmra.mrb[0].mxu0 %v232
    %v300 = vpop.f32.mrb[0].mxu0
    %v301 = vadd.f32 0.0, %v300
    %v302 = vpop.f32.mrb[0].mxu0
    %303 = vdwg.mxu0
    %v304 = vsel %vm82, -1e+30, %v301
    %305 = vmatprep.subr.mxu0 0.0
    %306 = vmatpush1.xpose.msra.mxu0 %v158
    %307 = vmatprep.subr.mxu0 0.0
    %308 = vmatpush1.xpose.msra.mxu0 0.0
    %309 = vmatprep.subr.mxu0 0.0
    %310 = vmatpush1.xpose.msra.mxu0 0.0
    %311 = vmatprep.subr.mxu0 0.0
    %312 = vmatpush1.xpose.msra.mxu0 0.0
    %313 = vmatprep.subr.mxu0 0.0
    %314 = vmatpush1.xpose.msra.mxu0 0.0
    %315 = vmatprep.subr.mxu0 0.0
    %316 = vmatpush1.xpose.msra.mxu0 0.0
    %317 = vmatprep.subr.mxu0 0.0
    %318 = vmatpush1.xpose.msra.mxu0 0.0
    %319 = vmatprep.subr.mxu0 0.0
    %320 = vmatpush1.xpose.msra.mxu0 0.0
    %321 = vmatprep.subr.mxu0 0.0
    %322 = vmatpush1.xpose.msra.mxu0 0.0
    %323 = vmatprep.subr.mxu0 0.0
    %324 = vmatpush1.xpose.msra.mxu0 0.0
    %325 = vmatprep.subr.mxu0 0.0
    %326 = vmatpush1.xpose.msra.mxu0 0.0
    %327 = vmatprep.subr.mxu0 0.0
    %328 = vmatpush1.xpose.msra.mxu0 0.0
    %329 = vmatprep.subr.mxu0 0.0
    %330 = vmatpush1.xpose.msra.mxu0 0.0
    %331 = vmatprep.subr.mxu0 0.0
    %332 = vmatpush1.xpose.msra.mxu0 0.0
    %333 = vmatprep.subr.mxu0 0.0
    %334 = vmatpush1.xpose.msra.mxu0 0.0
    %335 = vmatprep.subr.mxu0 0.0
    %336 = vmatpush1.xpose.msra.mxu0 0.0
    %337 = vmatprep.subr.mxu0 0.0
    %338 = vmatpush1.xpose.msra.mxu0 0.0
    %339 = vmatprep.subr.mxu0 0.0
    %340 = vmatpush1.xpose.msra.mxu0 0.0
    %341 = vmatprep.subr.mxu0 0.0
    %342 = vmatpush1.xpose.msra.mxu0 0.0
    %343 = vmatprep.subr.mxu0 0.0
    %344 = vmatpush1.xpose.msra.mxu0 0.0
    %345 = vmatprep.subr.mxu0 0.0
    %346 = vmatpush1.xpose.msra.mxu0 0.0
    %347 = vmatprep.subr.mxu0 0.0
    %348 = vmatpush1.xpose.msra.mxu0 0.0
    %349 = vmatprep.subr.mxu0 0.0
    %350 = vmatpush1.xpose.msra.mxu0 0.0
    %351 = vmatprep.subr.mxu0 0.0
    %352 = vmatpush1.xpose.msra.mxu0 0.0
    %353 = vmatprep.subr.mxu0 0.0
    %354 = vmatpush1.xpose.msra.mxu0 0.0
    %355 = vmatprep.subr.mxu0 0.0
    %356 = vmatpush1.xpose.msra.mxu0 0.0
    %357 = vmatprep.subr.mxu0 0.0
    %358 = vmatpush1.xpose.msra.mxu0 0.0
    %359 = vmatprep.subr.mxu0 0.0
    %360 = vmatpush1.xpose.msra.mxu0 0.0
    %361 = vmatprep.subr.mxu0 0.0
    %362 = vmatpush1.xpose.msra.mxu0 0.0
    %363 = vmatprep.subr.mxu0 0.0
    %364 = vmatpush1.xpose.msra.mxu0 0.0
    %365 = vmatprep.subr.mxu0 0.0
    %366 = vmatpush1.xpose.msra.mxu0 0.0
    %367 = vmatprep.subr.mxu0 0.0
    %368 = vmatpush1.xpose.msra.mxu0 0.0
    %369 = vmatprep.mubr.f32.mxu0 0.0
    %370 = vmatmul.mubr.f32.gmra.mrb[0].mxu0 %v84
    %v371 = vpop.f32.mrb[0].mxu0
    %v372 = vadd.f32 0.0, %v371
    %v373 = vpop.f32.mrb[0].mxu0
    %374 = vdwg.mxu0
    %375 = vmatprep.subr.mxu0 0.0
    %376 = vmatpush1.xpose.msra.mxu0 %v232
    %377 = vmatprep.subr.mxu0 0.0
    %378 = vmatpush1.xpose.msra.mxu0 0.0
    %379 = vmatprep.subr.mxu0 0.0
    %380 = vmatpush1.xpose.msra.mxu0 0.0
    %381 = vmatprep.subr.mxu0 0.0
    %382 = vmatpush1.xpose.msra.mxu0 0.0
    %383 = vmatprep.subr.mxu0 0.0
    %384 = vmatpush1.xpose.msra.mxu0 0.0
    %385 = vmatprep.subr.mxu0 0.0
    %386 = vmatpush1.xpose.msra.mxu0 0.0
    %387 = vmatprep.subr.mxu0 0.0
    %388 = vmatpush1.xpose.msra.mxu0 0.0
    %389 = vmatprep.subr.mxu0 0.0
    %390 = vmatpush1.xpose.msra.mxu0 0.0
    %391 = vmatprep.subr.mxu0 0.0
    %392 = vmatpush1.xpose.msra.mxu0 0.0
    %393 = vmatprep.subr.mxu0 0.0
    %394 = vmatpush1.xpose.msra.mxu0 0.0
    %395 = vmatprep.subr.mxu0 0.0
    %396 = vmatpush1.xpose.msra.mxu0 0.0
    %397 = vmatprep.subr.mxu0 0.0
    %398 = vmatpush1.xpose.msra.mxu0 0.0
    %399 = vmatprep.subr.mxu0 0.0
    %400 = vmatpush1.xpose.msra.mxu0 0.0
    %401 = vmatprep.subr.mxu0 0.0
    %402 = vmatpush1.xpose.msra.mxu0 0.0
    %403 = vmatprep.subr.mxu0 0.0
    %404 = vmatpush1.xpose.msra.mxu0 0.0
    %405 = vmatprep.subr.mxu0 0.0
    %406 = vmatpush1.xpose.msra.mxu0 0.0
    %407 = vmatprep.subr.mxu0 0.0
    %408 = vmatpush1.xpose.msra.mxu0 0.0
    %409 = vmatprep.subr.mxu0 0.0
    %410 = vmatpush1.xpose.msra.mxu0 0.0
    %411 = vmatprep.subr.mxu0 0.0
    %412 = vmatpush1.xpose.msra.mxu0 0.0
    %413 = vmatprep.subr.mxu0 0.0
    %414 = vmatpush1.xpose.msra.mxu0 0.0
    %415 = vmatprep.subr.mxu0 0.0
    %416 = vmatpush1.xpose.msra.mxu0 0.0
    %417 = vmatprep.subr.mxu0 0.0
    %418 = vmatpush1.xpose.msra.mxu0 0.0
    %419 = vmatprep.subr.mxu0 0.0
    %420 = vmatpush1.xpose.msra.mxu0 0.0
    %421 = vmatprep.subr.mxu0 0.0
    %422 = vmatpush1.xpose.msra.mxu0 0.0
    %423 = vmatprep.subr.mxu0 0.0
    %424 = vmatpush1.xpose.msra.mxu0 0.0
    %425 = vmatprep.subr.mxu0 0.0
    %426 = vmatpush1.xpose.msra.mxu0 0.0
    %427 = vmatprep.subr.mxu0 0.0
    %428 = vmatpush1.xpose.msra.mxu0 0.0
    %429 = vmatprep.subr.mxu0 0.0
    %430 = vmatpush1.xpose.msra.mxu0 0.0
    %431 = vmatprep.subr.mxu0 0.0
    %432 = vmatpush1.xpose.msra.mxu0 0.0
    %433 = vmatprep.subr.mxu0 0.0
    %434 = vmatpush1.xpose.msra.mxu0 0.0
    %435 = vmatprep.subr.mxu0 0.0
    %436 = vmatpush1.xpose.msra.mxu0 0.0
    %437 = vmatprep.subr.mxu0 0.0
    %438 = vmatpush1.xpose.msra.mxu0 0.0
    %439 = vmatprep.mubr.f32.mxu0 0.0
    %440 = vmatmul.mubr.f32.gmra.mrb[0].mxu0 %v84
    %v441 = vpop.f32.mrb[0].mxu0
    %v442 = vadd.f32 0.0, %v441
    %v443 = vpop.f32.mrb[0].mxu0
    %444 = vdwg.mxu0
    %445 = vmatprep.subr.mxu0 0.0
    %446 = vmatpush1.xpose.msra.mxu0 %v232
    %447 = vmatprep.subr.mxu0 0.0
    %448 = vmatpush1.xpose.msra.mxu0 0.0
    %449 = vmatprep.subr.mxu0 0.0
    %450 = vmatpush1.xpose.msra.mxu0 0.0
    %451 = vmatprep.subr.mxu0 0.0
    %452 = vmatpush1.xpose.msra.mxu0 0.0
    %453 = vmatprep.subr.mxu0 0.0
    %454 = vmatpush1.xpose.msra.mxu0 0.0
    %455 = vmatprep.subr.mxu0 0.0
    %456 = vmatpush1.xpose.msra.mxu0 0.0
    %457 = vmatprep.subr.mxu0 0.0
    %458 = vmatpush1.xpose.msra.mxu0 0.0
    %459 = vmatprep.subr.mxu0 0.0
    %460 = vmatpush1.xpose.msra.mxu0 0.0
    %461 = vmatprep.subr.mxu0 0.0
    %462 = vmatpush1.xpose.msra.mxu0 0.0
    %463 = vmatprep.subr.mxu0 0.0
    %464 = vmatpush1.xpose.msra.mxu0 0.0
    %465 = vmatprep.subr.mxu0 0.0
    %466 = vmatpush1.xpose.msra.mxu0 0.0
    %467 = vmatprep.subr.mxu0 0.0
    %468 = vmatpush1.xpose.msra.mxu0 0.0
    %469 = vmatprep.subr.mxu0 0.0
    %470 = vmatpush1.xpose.msra.mxu0 0.0
    %471 = vmatprep.subr.mxu0 0.0
    %472 = vmatpush1.xpose.msra.mxu0 0.0
    %473 = vmatprep.subr.mxu0 0.0
    %474 = vmatpush1.xpose.msra.mxu0 0.0
    %475 = vmatprep.subr.mxu0 0.0
    %476 = vmatpush1.xpose.msra.mxu0 0.0
    %477 = vmatprep.subr.mxu0 0.0
    %478 = vmatpush1.xpose.msra.mxu0 0.0
    %479 = vmatprep.subr.mxu0 0.0
    %480 = vmatpush1.xpose.msra.mxu0 0.0
    %481 = vmatprep.subr.mxu0 0.0
    %482 = vmatpush1.xpose.msra.mxu0 0.0
    %483 = vmatprep.subr.mxu0 0.0
    %484 = vmatpush1.xpose.msra.mxu0 0.0
    %485 = vmatprep.subr.mxu0 0.0
    %486 = vmatpush1.xpose.msra.mxu0 0.0
    %487 = vmatprep.subr.mxu0 0.0
    %488 = vmatpush1.xpose.msra.mxu0 0.0
    %489 = vmatprep.subr.mxu0 0.0
    %490 = vmatpush1.xpose.msra.mxu0 0.0
    %491 = vmatprep.subr.mxu0 0.0
    %492 = vmatpush1.xpose.msra.mxu0 0.0
    %493 = vmatprep.subr.mxu0 0.0
    %494 = vmatpush1.xpose.msra.mxu0 0.0
    %495 = vmatprep.subr.mxu0 0.0
    %496 = vmatpush1.xpose.msra.mxu0 0.0
    %497 = vmatprep.subr.mxu0 0.0
    %498 = vmatpush1.xpose.msra.mxu0 0.0
    %499 = vmatprep.subr.mxu0 0.0
    %500 = vmatpush1.xpose.msra.mxu0 0.0
    %501 = vmatprep.subr.mxu0 0.0
    %502 = vmatpush1.xpose.msra.mxu0 0.0
    %503 = vmatprep.subr.mxu0 0.0
    %504 = vmatpush1.xpose.msra.mxu0 0.0
    %505 = vmatprep.subr.mxu0 0.0
    %506 = vmatpush1.xpose.msra.mxu0 0.0
    %507 = vmatprep.subr.mxu0 0.0
    %508 = vmatpush1.xpose.msra.mxu0 0.0
    %509 = vmatprep.mubr.f32.mxu0 0.0
    %510 = vmatmul.mubr.f32.gmra.mrb[0].mxu0 %v158
    %v511 = vpop.f32.mrb[0].mxu0
    %v512 = vadd.f32 0.0, %v511
    %v513 = vpop.f32.mrb[0].mxu0
    %514 = vdwg.mxu0
    %515 = vmatprep.subr.mxu0 0.0
    %516 = vmatpush1.xpose.msra.mxu0 %v84
    %517 = vmatprep.subr.mxu0 0.0
    %518 = vmatpush1.xpose.msra.mxu0 0.0
    %519 = vmatprep.subr.mxu0 0.0
    %520 = vmatpush1.xpose.msra.mxu0 0.0
    %521 = vmatprep.subr.mxu0 0.0
    %522 = vmatpush1.xpose.msra.mxu0 0.0
    %523 = vmatprep.subr.mxu0 0.0
    %524 = vmatpush1.xpose.msra.mxu0 0.0
    %525 = vmatprep.subr.mxu0 0.0
    %526 = vmatpush1.xpose.msra.mxu0 0.0
    %527 = vmatprep.subr.mxu0 0.0
    %528 = vmatpush1.xpose.msra.mxu0 0.0
    %529 = vmatprep.subr.mxu0 0.0
    %530 = vmatpush1.xpose.msra.mxu0 0.0
    %531 = vmatprep.subr.mxu0 0.0
    %532 = vmatpush1.xpose.msra.mxu0 0.0
    %533 = vmatprep.subr.mxu0 0.0
    %534 = vmatpush1.xpose.msra.mxu0 0.0
    %535 = vmatprep.subr.mxu0 0.0
    %536 = vmatpush1.xpose.msra.mxu0 0.0
    %537 = vmatprep.subr.mxu0 0.0
    %538 = vmatpush1.xpose.msra.mxu0 0.0
    %539 = vmatprep.subr.mxu0 0.0
    %540 = vmatpush1.xpose.msra.mxu0 0.0
    %541 = vmatprep.subr.mxu0 0.0
    %542 = vmatpush1.xpose.msra.mxu0 0.0
    %543 = vmatprep.subr.mxu0 0.0
    %544 = vmatpush1.xpose.msra.mxu0 0.0
    %545 = vmatprep.subr.mxu0 0.0
    %546 = vmatpush1.xpose.msra.mxu0 0.0
    %547 = vmatprep.subr.mxu0 0.0
    %548 = vmatpush1.xpose.msra.mxu0 0.0
    %549 = vmatprep.subr.mxu0 0.0
    %550 = vmatpush1.xpose.msra.mxu0 0.0
    %551 = vmatprep.subr.mxu0 0.0
    %552 = vmatpush1.xpose.msra.mxu0 0.0
    %553 = vmatprep.subr.mxu0 0.0
    %554 = vmatpush1.xpose.msra.mxu0 0.0
    %555 = vmatprep.subr.mxu0 0.0
    %556 = vmatpush1.xpose.msra.mxu0 0.0
    %557 = vmatprep.subr.mxu0 0.0
    %558 = vmatpush1.xpose.msra.mxu0 0.0
    %559 = vmatprep.subr.mxu0 0.0
    %560 = vmatpush1.xpose.msra.mxu0 0.0
    %561 = vmatprep.subr.mxu0 0.0
    %562 = vmatpush1.xpose.msra.mxu0 0.0
    %563 = vmatprep.subr.mxu0 0.0
    %564 = vmatpush1.xpose.msra.mxu0 0.0
    %565 = vmatprep.subr.mxu0 0.0
    %566 = vmatpush1.xpose.msra.mxu0 0.0
    %567 = vmatprep.subr.mxu0 0.0
    %568 = vmatpush1.xpose.msra.mxu0 0.0
    %569 = vmatprep.subr.mxu0 0.0
    %570 = vmatpush1.xpose.msra.mxu0 0.0
    %571 = vmatprep.subr.mxu0 0.0
    %572 = vmatpush1.xpose.msra.mxu0 0.0
    %573 = vmatprep.subr.mxu0 0.0
    %574 = vmatpush1.xpose.msra.mxu0 0.0
    %575 = vmatprep.subr.mxu0 0.0
    %576 = vmatpush1.xpose.msra.mxu0 0.0
    %577 = vmatprep.subr.mxu0 0.0
    %578 = vmatpush1.xpose.msra.mxu0 0.0
    %579 = vmatprep.mubr.f32.mxu0 0.0
    %580 = vmatmul.mubr.f32.gmra.mrb[0].mxu0 %v158
    %v581 = vpop.f32.mrb[0].mxu0
    %v582 = vadd.f32 0.0, %v581
    %v583 = vpop.f32.mrb[0].mxu0
    %584 = vdwg.mxu0
    %585 = vmatprep.subr.mxu0 0.0
    %586 = vmatpush1.xpose.msra.mxu0 %v84
    %587 = vmatprep.subr.mxu0 0.0
    %588 = vmatpush1.xpose.msra.mxu0 0.0
    %589 = vmatprep.subr.mxu0 0.0
    %590 = vmatpush1.xpose.msra.mxu0 0.0
    %591 = vmatprep.subr.mxu0 0.0
    %592 = vmatpush1.xpose.msra.mxu0 0.0
    %593 = vmatprep.subr.mxu0 0.0
    %594 = vmatpush1.xpose.msra.mxu0 0.0
    %595 = vmatprep.subr.mxu0 0.0
    %596 = vmatpush1.xpose.msra.mxu0 0.0
    %597 = vmatprep.subr.mxu0 0.0
    %598 = vmatpush1.xpose.msra.mxu0 0.0
    %599 = vmatprep.subr.mxu0 0.0
    %600 = vmatpush1.xpose.msra.mxu0 0.0
    %601 = vmatprep.subr.mxu0 0.0
    %602 = vmatpush1.xpose.msra.mxu0 0.0
    %603 = vmatprep.subr.mxu0 0.0
    %604 = vmatpush1.xpose.msra.mxu0 0.0
    %605 = vmatprep.subr.mxu0 0.0
    %606 = vmatpush1.xpose.msra.mxu0 0.0
    %607 = vmatprep.subr.mxu0 0.0
    %608 = vmatpush1.xpose.msra.mxu0 0.0
    %609 = vmatprep.subr.mxu0 0.0
    %610 = vmatpush1.xpose.msra.mxu0 0.0
    %611 = vmatprep.subr.mxu0 0.0
    %612 = vmatpush1.xpose.msra.mxu0 0.0
    %613 = vmatprep.subr.mxu0 0.0
    %614 = vmatpush1.xpose.msra.mxu0 0.0
    %615 = vmatprep.subr.mxu0 0.0
    %616 = vmatpush1.xpose.msra.mxu0 0.0
    %617 = vmatprep.subr.mxu0 0.0
    %618 = vmatpush1.xpose.msra.mxu0 0.0
    %619 = vmatprep.subr.mxu0 0.0
    %620 = vmatpush1.xpose.msra.mxu0 0.0
    %621 = vmatprep.subr.mxu0 0.0
    %622 = vmatpush1.xpose.msra.mxu0 0.0
    %623 = vmatprep.subr.mxu0 0.0
    %624 = vmatpush1.xpose.msra.mxu0 0.0
    %625 = vmatprep.subr.mxu0 0.0
    %626 = vmatpush1.xpose.msra.mxu0 0.0
    %627 = vmatprep.subr.mxu0 0.0
    %628 = vmatpush1.xpose.msra.mxu0 0.0
    %629 = vmatprep.subr.mxu0 0.0
    %630 = vmatpush1.xpose.msra.mxu0 0.0
    %631 = vmatprep.subr.mxu0 0.0
    %632 = vmatpush1.xpose.msra.mxu0 0.0
    %633 = vmatprep.subr.mxu0 0.0
    %634 = vmatpush1.xpose.msra.mxu0 0.0
    %635 = vmatprep.subr.mxu0 0.0
    %636 = vmatpush1.xpose.msra.mxu0 0.0
    %637 = vmatprep.subr.mxu0 0.0
    %638 = vmatpush1.xpose.msra.mxu0 0.0
    %639 = vmatprep.subr.mxu0 0.0
    %640 = vmatpush1.xpose.msra.mxu0 0.0
    %641 = vmatprep.subr.mxu0 0.0
    %642 = vmatpush1.xpose.msra.mxu0 0.0
    %643 = vmatprep.subr.mxu0 0.0
    %644 = vmatpush1.xpose.msra.mxu0 0.0
    %645 = vmatprep.subr.mxu0 0.0
    %646 = vmatpush1.xpose.msra.mxu0 0.0
    %647 = vmatprep.subr.mxu0 0.0
    %648 = vmatpush1.xpose.msra.mxu0 0.0
    %649 = vmatprep.mubr.f32.mxu0 0.0
    %650 = vmatmul.mubr.f32.gmra.mrb[0].mxu0 %v232
    %v651 = vpop.f32.mrb[0].mxu0
    %v652 = vadd.f32 0.0, %v651
    %v653 = vpop.f32.mrb[0].mxu0
    %654 = vdwg.mxu0
    %655 = vmatprep.subr.mxu0 0.0
    %656 = vmatpush1.xpose.msra.mxu0 %v158
    %657 = vmatprep.subr.mxu0 0.0
    %658 = vmatpush1.xpose.msra.mxu0 0.0
    %659 = vmatprep.subr.mxu0 0.0
    %660 = vmatpush1.xpose.msra.mxu0 0.0
    %661 = vmatprep.subr.mxu0 0.0
    %662 = vmatpush1.xpose.msra.mxu0 0.0
    %663 = vmatprep.subr.mxu0 0.0
    %664 = vmatpush1.xpose.msra.mxu0 0.0
    %665 = vmatprep.subr.mxu0 0.0
    %666 = vmatpush1.xpose.msra.mxu0 0.0
    %667 = vmatprep.subr.mxu0 0.0
    %668 = vmatpush1.xpose.msra.mxu0 0.0
    %669 = vmatprep.subr.mxu0 0.0
    %670 = vmatpush1.xpose.msra.mxu0 0.0
    %671 = vmatprep.subr.mxu0 0.0
    %672 = vmatpush1.xpose.msra.mxu0 0.0
    %673 = vmatprep.subr.mxu0 0.0
    %674 = vmatpush1.xpose.msra.mxu0 0.0
    %675 = vmatprep.subr.mxu0 0.0
    %676 = vmatpush1.xpose.msra.mxu0 0.0
    %677 = vmatprep.subr.mxu0 0.0
    %678 = vmatpush1.xpose.msra.mxu0 0.0
    %679 = vmatprep.subr.mxu0 0.0
    %680 = vmatpush1.xpose.msra.mxu0 0.0
    %681 = vmatprep.subr.mxu0 0.0
    %682 = vmatpush1.xpose.msra.mxu0 0.0
    %683 = vmatprep.subr.mxu0 0.0
    %684 = vmatpush1.xpose.msra.mxu0 0.0
    %685 = vmatprep.subr.mxu0 0.0
    %686 = vmatpush1.xpose.msra.mxu0 0.0
    %687 = vmatprep.subr.mxu0 0.0
    %688 = vmatpush1.xpose.msra.mxu0 0.0
    %689 = vmatprep.subr.mxu0 0.0
    %690 = vmatpush1.xpose.msra.mxu0 0.0
    %691 = vmatprep.subr.mxu0 0.0
    %692 = vmatpush1.xpose.msra.mxu0 0.0
    %693 = vmatprep.subr.mxu0 0.0
    %694 = vmatpush1.xpose.msra.mxu0 0.0
    %695 = vmatprep.subr.mxu0 0.0
    %696 = vmatpush1.xpose.msra.mxu0 0.0
    %697 = vmatprep.subr.mxu0 0.0
    %698 = vmatpush1.xpose.msra.mxu0 0.0
    %699 = vmatprep.subr.mxu0 0.0
    %700 = vmatpush1.xpose.msra.mxu0 0.0
    %701 = vmatprep.subr.mxu0 0.0
    %702 = vmatpush1.xpose.msra.mxu0 0.0
    %703 = vmatprep.subr.mxu0 0.0
    %704 = vmatpush1.xpose.msra.mxu0 0.0
    %705 = vmatprep.subr.mxu0 0.0
    %706 = vmatpush1.xpose.msra.mxu0 0.0
    %707 = vmatprep.subr.mxu0 0.0
    %708 = vmatpush1.xpose.msra.mxu0 0.0
    %709 = vmatprep.subr.mxu0 0.0
    %710 = vmatpush1.xpose.msra.mxu0 0.0
    %711 = vmatprep.subr.mxu0 0.0
    %712 = vmatpush1.xpose.msra.mxu0 0.0
    %713 = vmatprep.subr.mxu0 0.0
    %714 = vmatpush1.xpose.msra.mxu0 0.0
    %715 = vmatprep.subr.mxu0 0.0
    %716 = vmatpush1.xpose.msra.mxu0 0.0
    %717 = vmatprep.subr.mxu0 0.0
    %718 = vmatpush1.xpose.msra.mxu0 0.0
    %719 = vmatprep.mubr.f32.mxu0 0.0
    %720 = vmatmul.mubr.f32.gmra.mrb[0].mxu0 %v232
    %v721 = vpop.f32.mrb[0].mxu0
    %v722 = vadd.f32 0.0, %v721
    %v723 = vpop.f32.mrb[0].mxu0
    %724 = vdwg.mxu0
    %vm725 = vcmask 64512
    %v726 = vsel %vm725, %v156, -inf
    %727 = vmax.xlane.f32.xlu0 %v726
    %v728 = vpop.xlane.xlu0 %727
    %v729 = vsel %vm725, %v372, -inf
    %730 = vmax.xlane.f32.xlu0 %v729
    %v731 = vpop.xlane.xlu0 %730
    %v732 = vmax.f32 %v728, %v731
    %v733 = vsel %vm725, %v442, -inf
    %734 = vmax.xlane.f32.xlu0 %v733
    %v735 = vpop.xlane.xlu0 %734
    %v736 = vmax.f32 %v732, %v735
    %v737 = vsel %vm725, %v582, -inf
    %738 = vmax.xlane.f32.xlu0 %v737
    %v739 = vpop.xlane.xlu0 %738
    %v740 = vsel %vm725, %v230, -inf
    %741 = vmax.xlane.f32.xlu0 %v740
    %v742 = vpop.xlane.xlu0 %741
    %v743 = vmax.f32 %v739, %v742
    %v744 = vsel %vm725, %v512, -inf
    %745 = vmax.xlane.f32.xlu0 %v744
    %v746 = vpop.xlane.xlu0 %745
    %v747 = vmax.f32 %v743, %v746
    %v748 = vsel %vm725, %v652, -inf
    %749 = vmax.xlane.f32.xlu0 %v748
    %v750 = vpop.xlane.xlu0 %749
    %v751 = vsel %vm725, %v722, -inf
    %752 = vmax.xlane.f32.xlu0 %v751
    %v753 = vpop.xlane.xlu0 %752
    %v754 = vmax.f32 %v750, %v753
    %v755 = vsel %vm725, %v304, -inf
    %756 = vmax.xlane.f32.xlu0 %v755
    %v757 = vpop.xlane.xlu0 %756
    %v758 = vmax.f32 %v754, %v757
    %v759 = vsub.f32 %v156, %v736
    %v760 = vmul.f32 %v759, 1.442695
    %v761 = vpow.pop %v760
    %v762 = vsel %vm725, %v761, 0.0
    %763 = vadd.xlane.f32.xlu0 %v762
    %v764 = vpop.xlane.xlu0 %763
    %v765 = vsub.f32 %v372, %v736
    %v766 = vmul.f32 %v765, 1.442695
    %v767 = vpow.pop %v766
    %v768 = vsel %vm725, %v767, 0.0
    %769 = vadd.xlane.f32.xlu0 %v768
    %v770 = vpop.xlane.xlu0 %769
    %v771 = vsub.f32 %v442, %v736
    %v772 = vmul.f32 %v771, 1.442695
    %v773 = vpow.pop %v772
    %v774 = vsel %vm725, %v773, 0.0
    %775 = vadd.xlane.f32.xlu0 %v774
    %v776 = vpop.xlane.xlu0 %775
    %v777 = vsub.f32 %v582, %v747
    %v778 = vmul.f32 %v777, 1.442695
    %v779 = vpow.pop %v778
    %v780 = vsel %vm725, %v779, 0.0
    %781 = vadd.xlane.f32.xlu0 %v780
    %v782 = vpop.xlane.xlu0 %781
    %v783 = vsub.f32 %v230, %v747
    %v784 = vmul.f32 %v783, 1.442695
    %v785 = vpow.pop %v784
    %v786 = vsel %vm725, %v785, 0.0
    %787 = vadd.xlane.f32.xlu0 %v786
    %v788 = vpop.xlane.xlu0 %787
    %v789 = vsub.f32 %v512, %v747
    %v790 = vmul.f32 %v789, 1.442695
    %v791 = vpow.pop %v790
    %v792 = vsel %vm725, %v791, 0.0
    %793 = vadd.xlane.f32.xlu0 %v792
    %v794 = vpop.xlane.xlu0 %793
    %v795 = vsub.f32 %v652, %v758
    %v796 = vmul.f32 %v795, 1.442695
    %v797 = vpow.pop %v796
    %v798 = vsel %vm725, %v797, 0.0
    %799 = vadd.xlane.f32.xlu0 %v798
    %v800 = vpop.xlane.xlu0 %799
    %v801 = vsub.f32 %v722, %v758
    %v802 = vmul.f32 %v801, 1.442695
    %v803 = vpow.pop %v802
    %v804 = vsel %vm725, %v803, 0.0
    %805 = vadd.xlane.f32.xlu0 %v804
    %v806 = vpop.xlane.xlu0 %805
    %v807 = vsub.f32 %v304, %v758
    %v808 = vmul.f32 %v807, 1.442695
    %v809 = vpow.pop %v808
    %v810 = vsel %vm725, %v809, 0.0
    %811 = vadd.xlane.f32.xlu0 %v810
    %v812 = vpop.xlane.xlu0 %811
    %v813 = vmul.f32 %v59, %v68
    %v814 = vsel %vm52, %v813, 0.0
    %815 = vadd.xlane.f32.xlu0 %v814
    %v816 = vpop.xlane.xlu0 %815
    %v817 = vrot.slane %v816, 4
    %v818 = vadd.f32 %v816, %v817
    %v819 = vrot.slane %v818, 2
    %v820 = vadd.f32 %v818, %v819
    %v821 = vrot.slane %v820, 1
    %v822 = vadd.f32 %v820, %v821
    %s823 = vtos %v822
    %v824 = vmul.f32 %v59, %v77
    %v825 = vsel %vm52, %v824, 0.0
    %826 = vadd.xlane.f32.xlu0 %v825
    %v827 = vpop.xlane.xlu0 %826
    %v828 = vrot.slane %v827, 4
    %v829 = vadd.f32 %v827, %v828
    %v830 = vrot.slane %v829, 2
    %v831 = vadd.f32 %v829, %v830
    %v832 = vrot.slane %v831, 1
    %v833 = vadd.f32 %v831, %v832
    %s834 = vtos %v833
    %v835 = vmul.f32 %v68, %v77
    %v836 = vsel %vm52, %v835, 0.0
    %837 = vadd.xlane.f32.xlu0 %v836
    %v838 = vpop.xlane.xlu0 %837
    %v839 = vrot.slane %v838, 4
    %v840 = vadd.f32 %v838, %v839
    %v841 = vrot.slane %v840, 2
    %v842 = vadd.f32 %v840, %v841
    %v843 = vrot.slane %v842, 1
    %v844 = vadd.f32 %v842, %v843
    %s845 = vtos %v844
    %v846 = vadd.f32 %v764, %v770
    %v847 = vlog2.pop %v846
    %v848 = vmul.f32 %v847, 0.6931472
    %v849 = vadd.f32 %v736, %v848
    %vm850 = vcmask 7168
    %v851 = vsel %vm850, %v849, 0.0
    %852 = vadd.xlane.f32.xlu0 %v851
    %v853 = vpop.xlane.xlu0 %852
    %v854 = vrot.slane %v853, 4
    %v855 = vadd.f32 %v853, %v854
    %v856 = vrot.slane %v855, 2
    %v857 = vadd.f32 %v855, %v856
    %v858 = vrot.slane %v857, 1
    %v859 = vadd.f32 %v857, %v858
    %s860 = vtos %v859
    %v861 = vadd.f32 %v782, %v788
    %v862 = vlog2.pop %v861
    %v863 = vmul.f32 %v862, 0.6931472
    %v864 = vadd.f32 %v747, %v863
    %v865 = vsel %vm850, %v864, 0.0
    %866 = vadd.xlane.f32.xlu0 %v865
    %v867 = vpop.xlane.xlu0 %866
    %v868 = vrot.slane %v867, 4
    %v869 = vadd.f32 %v867, %v868
    %v870 = vrot.slane %v869, 2
    %v871 = vadd.f32 %v869, %v870
    %v872 = vrot.slane %v871, 1
    %v873 = vadd.f32 %v871, %v872
    %s874 = vtos %v873
    %s875 = sadd.f32 %s860, %s874
    %s876 = smul.f32 %s823, 2.0
    %s877 = ssub.f32 %s875, %s876
    %s878 = smul.f32 %s877, 0.0625
    %v879 = vadd.f32 %v764, %v776
    %v880 = vlog2.pop %v879
    %v881 = vmul.f32 %v880, 0.6931472
    %v882 = vadd.f32 %v736, %v881
    %v883 = vsel %vm850, %v882, 0.0
    %884 = vadd.xlane.f32.xlu0 %v883
    %v885 = vpop.xlane.xlu0 %884
    %v886 = vrot.slane %v885, 4
    %v887 = vadd.f32 %v885, %v886
    %v888 = vrot.slane %v887, 2
    %v889 = vadd.f32 %v887, %v888
    %v890 = vrot.slane %v889, 1
    %v891 = vadd.f32 %v889, %v890
    %s892 = vtos %v891
    %v893 = vadd.f32 %v800, %v812
    %v894 = vlog2.pop %v893
    %v895 = vmul.f32 %v894, 0.6931472
    %v896 = vadd.f32 %v758, %v895
    %v897 = vsel %vm850, %v896, 0.0
    %898 = vadd.xlane.f32.xlu0 %v897
    %v899 = vpop.xlane.xlu0 %898
    %v900 = vrot.slane %v899, 4
    %v901 = vadd.f32 %v899, %v900
    %v902 = vrot.slane %v901, 2
    %v903 = vadd.f32 %v901, %v902
    %v904 = vrot.slane %v903, 1
    %v905 = vadd.f32 %v903, %v904
    %s906 = vtos %v905
    %s907 = sadd.f32 %s892, %s906
    %s908 = smul.f32 %s834, 2.0
    %s909 = ssub.f32 %s907, %s908
    %s910 = smul.f32 %s909, 0.0625
    %v911 = vadd.f32 %v788, %v794
    %v912 = vlog2.pop %v911
    %v913 = vmul.f32 %v912, 0.6931472
    %v914 = vadd.f32 %v747, %v913
    %v915 = vsel %vm850, %v914, 0.0
    %916 = vadd.xlane.f32.xlu0 %v915
    %v917 = vpop.xlane.xlu0 %916
    %v918 = vrot.slane %v917, 4
    %v919 = vadd.f32 %v917, %v918
    %v920 = vrot.slane %v919, 2
    %v921 = vadd.f32 %v919, %v920
    %v922 = vrot.slane %v921, 1
    %v923 = vadd.f32 %v921, %v922
    %s924 = vtos %v923
    %v925 = vadd.f32 %v806, %v812
    %v926 = vlog2.pop %v925
    %v927 = vmul.f32 %v926, 0.6931472
    %v928 = vadd.f32 %v758, %v927
    %v929 = vsel %vm850, %v928, 0.0
    %930 = vadd.xlane.f32.xlu0 %v929
    %v931 = vpop.xlane.xlu0 %930
    %v932 = vrot.slane %v931, 4
    %v933 = vadd.f32 %v931, %v932
    %v934 = vrot.slane %v933, 2
    %v935 = vadd.f32 %v933, %v934
    %v936 = vrot.slane %v935, 1
    %v937 = vadd.f32 %v935, %v936
    %s938 = vtos %v937
    %s939 = sadd.f32 %s924, %s938
    %s940 = smul.f32 %s845, 2.0
    %s941 = ssub.f32 %s939, %s940
    %s942 = smul.f32 %s941, 0.0625
    %s943 = sadd.f32 %s878, %s910
    %s944 = sadd.f32 %s943, %s942
    %s945 = smul.f32 %s944, 0.33333334
    %s946 = scalar_lea.smem [#allocation8], 0
    %947 = sst [smem:[%s946]] %s945
    // Predicated region
    $region26: #{triplet_ntxent_loss.1} parent=1 // pred_check
      _
    $region27: #{triplet_ntxent_loss.1} parent=1 // pred_check_branch
      %949 = sbr.rel (0) target = $region29
    $region28: #{triplet_ntxent_loss.1} parent=1 // pred_region
      %s951 = ssub.s32 16, 16
      %952 = vsyncadd [#allocation4], %s951
      %955 = dma.smem_to_hbm [#allocation8], 16, %s3, [#allocation4]
    $region29: #{triplet_ntxent_loss.1} parent=1 // pred_fallthru
      _
    // Predicated region
    $region30: #{triplet_ntxent_loss.1} parent=1 // pred_check
      _
    $region31: #{triplet_ntxent_loss.1} parent=1 // pred_check_branch
      %957 = sbr.rel (0) target = $region33
    $region32: #{triplet_ntxent_loss.1} parent=1 // pred_region
      %958 = dma.done [#allocation4], 16
    $region33: #{triplet_ntxent_loss.1} parent=1 // pred_fallthru
      _
    %959 = sfence
    %960 = vsyncpa [#allocation3], 1
    %961 = vsyncpa [#allocation6], 1
    %962 = vsyncpa [#allocation4], 1

</llo_original>
